<compile_context>
chip_gen: v7x
topology: tpu7x:2x2x1
jax: 0.10.0
libtpu: 0.0.40
codegen_flags: <defaults>
</compile_context>

<pallas_src>
import jax
import jax.numpy as jnp
from jax.experimental import pallas as pl
from jax.experimental.pallas import tpu as pltpu


_TARGET_BLOCK_BYTES = 4 * 1024 * 1024   # ~4 MiB/block -> 4x double-buffered = 16 MiB
_VMEM_LIMIT_BYTES = 48 * 1024 * 1024    # > v5e 16 MiB scoped default, < v7x 64 MiB physical


def identity(x: jax.Array) -> jax.Array:
    """True identity: zero HBM traffic.  Preferred outside this exercise."""
    return x


def _identity_kernel(x_ref, o_ref):
    # Forward pass of Indentity is `return x` -> pure tile copy.
    o_ref[...] = x_ref[...]


def identity_pallas(x: jax.Array) -> jax.Array:
    """Pallas copy-kernel implementation of Indentity.forward."""
    orig_shape = x.shape
    total = x.size
    if total == 0:
        return x

    # Pick the widest lane-dense last dim (multiple of 128) that divides the
    # element count exactly -> full-width unmasked vst, no padding needed.
    lanes = None
    for cand in (512, 256, 128):
        if total % cand == 0:
            lanes = cand
            break
    if lanes is None:
        # Ragged size: a pad + slice round trip outside the kernel would cost
        # ~3x the HBM traffic of the copy itself, so just return x (exact
        # identity semantics either way).
        return x

    rows = total // lanes
    itemsize = jnp.dtype(x.dtype).itemsize
    x2 = x.reshape(rows, lanes)

    # Sublane alignment for the block's row dim (sub-32-bit dtypes pack along
    # sublanes: f32 -> 8, bf16 -> 16, int8 -> 32).
    packing = max(1, 4 // itemsize)
    row_align = 8 * packing

    # ~4 MiB blocks, row-aligned.
    tile_rows = max(row_align, _TARGET_BLOCK_BYTES // (lanes * itemsize))
    tile_rows -= tile_rows % row_align

    if tile_rows >= rows:
        if rows >= 2 * row_align:
            # Whole array would fit in one block: split into >=2 programs so
            # both v7x TensorCores get work (harmless on 1-TC v5e/v6e).
            half = (rows + 1) // 2
            tile_rows = ((half + row_align - 1) // row_align) * row_align
        else:
            # Tiny array: single block equal to the full array shape (allowed
            # even when rows < row_align).
            tile_rows = rows

    grid = (pl.cdiv(rows, tile_rows),)

    out = pl.pallas_call(
        _identity_kernel,
        out_shape=jax.ShapeDtypeStruct((rows, lanes), x.dtype),
        grid_spec=pltpu.PrefetchScalarGridSpec(
            num_scalar_prefetch=0,
            grid=grid,
            in_specs=[pl.BlockSpec((tile_rows, lanes), lambda i: (i, 0))],
            out_specs=pl.BlockSpec((tile_rows, lanes), lambda i: (i, 0)),
        ),
        compiler_params=pltpu.CompilerParams(
            dimension_semantics=("parallel",),
            vmem_limit_bytes=_VMEM_LIMIT_BYTES,
        ),
        cost_estimate=pl.CostEstimate(
            flops=0,
            transcendentals=0,
            bytes_accessed=2 * total * itemsize,  # read + write every byte
        ),
    )(x2)

    return out.reshape(orig_shape)


if __name__ == "__main__":
    key = jax.random.PRNGKey(0)
    # Small NCHW-style input consistent with the module interface.
    x = jax.random.normal(key, (2, 4, 16, 16), dtype=jnp.float32)

    y = identity_pallas(x)
    jax.block_until_ready(y)

    # Exact identity semantics.
    assert y.shape == x.shape and y.dtype == x.dtype
    assert bool(jnp.all(y == x))

    print("KERNEL_OK")
</pallas_src>

<mosaic_0001>
module attributes {stable_mosaic.version = 11 : i64} {
  func.func @_identity_kernel(%arg0: i32, %arg1: memref<4x512xf32, #tpu.memory_space<vmem>>, %arg2: memref<4x512xf32, #tpu.memory_space<vmem>>) attributes {dimension_semantics = [#tpu.dimension_semantics<parallel>], iteration_bounds = array<i64: 1>, scalar_prefetch = 0 : i64, scratch_operands = 0 : i64, tpu.core_type = #tpu.core_type<tc>, window_params = [{transform_indices = @transform_0, window_bounds = array<i64: 4, 512>}, {transform_indices = @transform_1, window_bounds = array<i64: 4, 512>}]} {
    %c0 = arith.constant 0 : index
    %c0_0 = arith.constant 0 : index
    %0 = vector.load %arg1[%c0, %c0_0] : memref<4x512xf32, #tpu.memory_space<vmem>>, vector<4x512xf32>
    %c0_1 = arith.constant 0 : index
    %c0_2 = arith.constant 0 : index
    %1 = vector.load %arg2[%c0_1, %c0_2] : memref<4x512xf32, #tpu.memory_space<vmem>>, vector<4x512xf32>
    tpu.vector_store %arg2[%c0_1, %c0_2], %0 {strides = array<i32>} : memref<4x512xf32, #tpu.memory_space<vmem>>, vector<4x512xf32>,
    return
  }
  func.func @transform_0(%arg0: i32) -> (i32, i32) {
    %c0_i32 = arith.constant 0 : i32
    %c0_i32_0 = arith.constant 0 : i32
    return %arg0, %c0_i32 : i32, i32
  }
  func.func @transform_1(%arg0: i32) -> (i32, i32) {
    %c0_i32 = arith.constant 0 : i32
    %c0_i32_0 = arith.constant 0 : i32
    return %arg0, %c0_i32 : i32, i32
  }
}

</mosaic_0001>

<llo_original>
// kernel: tpu_custom_call.1
$region0: #{tpu_custom_call.1}
  #allocation0 [shape = 'u32[]', space=smem, size = 0x4, offset = 0x4, fixed_abs, tag = 'smem constant byte address 0x4 - core index']
  #allocation1 [shape = 'u32[144,128]{1,0:T(1,128)}', space=vmem, size = 0x12000, scoped, tag = 'internal scratch']
  %s0 = inlined_call_operand.hbm [shape: f32[4,512], index: 0, kind: input, shape index: {}]
  %s1 = inlined_call_operand.hbm [shape: f32[4,512], index: 1, kind: output, shape index: {}]
  %s2 = sld [smem:[#allocation0]]
  $region18: #{tpu_custom_call.1} parent=0
    _
  %s4 = ssub.s32 1, %s2
  %s5 = scalar_select 0, %s4, %s2
  $region1: #{tpu_custom_call.1} parent=0
    #allocation2 [shape = 'u8[8192]{0}', space=vmem, size = 0x2000, scoped, tag = 'input window, operand 0, single buffered']
    #allocation3 [shape = 's32[1]{0}', space=sflag, size = 0x4, scoped, tag = 'scoped memory for tpu_custom_call.1']
    #allocation4 [shape = 's32[1]{0}', space=sflag, size = 0x4, scoped, tag = 'scoped memory for tpu_custom_call.1']
    #allocation5 [shape = 'u8[8192]{0}', space=vmem, size = 0x2000, scoped, tag = 'output window, operand 0, single buffered']
    %6 = vsyncpa [#allocation3], 0
    %7 = vsyncpa [#allocation4], 0
    // Predicated region
    $region2: #{tpu_custom_call.1} parent=1 // pred_check
      _
    $region3: #{tpu_custom_call.1} parent=1 // pred_check_branch
      %9 = sbr.rel (0) target = $region5
    $region4: #{tpu_custom_call.1} parent=1 // pred_region
      %s11 = ssub.s32 256, 256
      %12 = vsyncadd [#allocation3], %s11
      %s14 = sshll.u32 [#allocation2], 4
      %s15 = int_to_ptr.vmem [resolvable:$true] %s14
      %17 = dma.hbm_to_vmem [thread:$0]  %s0, 256, %s15, [#allocation3]
    $region5: #{tpu_custom_call.1} parent=1 // pred_fallthru
      _
    // Predicated region
    $region6: #{tpu_custom_call.1} parent=1 // pred_check
      _
    $region7: #{tpu_custom_call.1} parent=1 // pred_check_branch
      %19 = sbr.rel (0) target = $region9
    $region8: #{tpu_custom_call.1} parent=1 // pred_region
      %20 = dma.done [#allocation3], 256
    $region9: #{tpu_custom_call.1} parent=1 // pred_fallthru
      _
    %v21 = vld [vmem:[#allocation2] sm:$0xff]
    %v22 = vld [vmem:[#allocation2 + $0x8] sm:$0xff]
    %23 = vst [vmem:[#allocation5] sm:$0xff] %v21
    %24 = vst [vmem:[#allocation5 + $0x8] sm:$0xff] %v22
    // Predicated region
    $region10: #{tpu_custom_call.1} parent=1 // pred_check
      _
    $region11: #{tpu_custom_call.1} parent=1 // pred_check_branch
      %26 = sbr.rel (0) target = $region13
    $region12: #{tpu_custom_call.1} parent=1 // pred_region
      %s28 = ssub.s32 256, 256
      %29 = vsyncadd [#allocation4], %s28
      %s31 = sshll.u32 [#allocation5], 4
      %s32 = int_to_ptr.vmem [resolvable:$true] %s31
      %34 = dma.vmem_to_hbm [thread:$0]  %s32, 256, %s1, [#allocation4]
    $region13: #{tpu_custom_call.1} parent=1 // pred_fallthru
      _
    // Predicated region
    $region14: #{tpu_custom_call.1} parent=1 // pred_check
      _
    $region15: #{tpu_custom_call.1} parent=1 // pred_check_branch
      %36 = sbr.rel (0) target = $region17
    $region16: #{tpu_custom_call.1} parent=1 // pred_region
      %37 = dma.done [#allocation4], 256
    $region17: #{tpu_custom_call.1} parent=1 // pred_fallthru
      _
    %38 = vsyncpa [#allocation3], 1
    %39 = vsyncpa [#allocation4], 1

</llo_original>
